<compile_context>
chip_gen: v7x
topology: tpu7x:2x2x1
jax: 0.10.0
libtpu: 0.0.40
codegen_flags: <defaults>
</compile_context>

<pallas_src>
import functools

import jax
import jax.numpy as jnp
from jax.experimental import pallas as pl
from jax.experimental.pallas import tpu as pltpu

_LANE = 128


def _chip_config():
    """Returns (block_elems, max_chunks) tuned per TPU generation."""
    try:
        kind = jax.devices()[0].device_kind.lower()
    except Exception:  # pragma: no cover - defensive
        kind = ""
    if "v7" in kind:
        # 2 TensorCores/chip; 4 MiB f32 per input per buffer amortizes the
        # ~0.35us/step overhead against 3.2 TB/s HBM and stays well under the
        # 32 MiB scoped-VMEM default (64 MiB physical).
        # TODO(synk): verify the "parallel" chunk axis actually shards across
        # the two TCs; otherwise switch that axis to pltpu.CORE_PARALLEL.
        return 1024 * 1024, 2
    if "v6" in kind:
        # Single TC; 4 MiB blocks reach ~85% of HBM roofline, no chunk split.
        return 1024 * 1024, 1
    # v5e and unknown chips: respect the 16 MiB scoped-VMEM default.
    return 256 * 1024, 1


def _dice_kernel(p_ref, t_ref, out_ref, inter_acc, union_acc, *,
                 steps_per_chunk, block_rows, lane_w, acc_rows, n_valid,
                 n_full_blocks):
    """Streams sigmoid(p)*t and sigmoid(p)+t into small VMEM accumulators;
    on the last step of each chunk does one cross-lane reduce and writes the
    (intersection, union) partial sums for that chunk."""
    c = pl.program_id(0)   # chunk axis ("parallel")
    s = pl.program_id(1)   # step within chunk ("arbitrary" / reduction)

    @pl.when(s == 0)
    def _():
        inter_acc[...] = jnp.zeros_like(inter_acc)
        union_acc[...] = jnp.zeros_like(union_acc)

    block_elems = block_rows * lane_w
    logical_block = c * steps_per_chunk + s
    groups = block_rows // acc_rows

    def _sigmoid(x):
        # Clamp so exp(-x) never overflows to inf (sigmoid(-30) ~ 9e-14 ~ 0);
        # approx reciprocal then runs on the EUP alongside the exp.
        x = jnp.maximum(x, -30.0)
        return pl.reciprocal(1.0 + jnp.exp(-x), approx=True)

    def _fold(v):
        # Fold (block_rows, lane_w) -> (acc_rows, lane_w) with plain vreg adds.
        if groups == 1:
            return v
        return v.reshape(groups, acc_rows, lane_w).sum(axis=0)

    @pl.when(logical_block < n_full_blocks)
    def _():
        # Fast path: the whole block is valid, no mask work.
        p = _sigmoid(p_ref[...].astype(jnp.float32))
        t = t_ref[...].astype(jnp.float32)
        inter_acc[...] += _fold(p * t)
        union_acc[...] += _fold(p + t)

    @pl.when(jnp.logical_and(logical_block >= n_full_blocks,
                             logical_block * block_elems < n_valid))
    def _():
        # Tail block: mask elements past the logical end (covers the padded
        # sub-128 tail and the partial last row-block).
        # TODO(synk): in-block index math is int32; inputs with >= 2^31
        # elements need a wider compare.
        p = _sigmoid(p_ref[...].astype(jnp.float32))
        t = t_ref[...].astype(jnp.float32)
        remaining = n_valid - logical_block * block_elems   # in (0, block_elems)
        row = jax.lax.broadcasted_iota(jnp.int32, (block_rows, lane_w), 0)
        lane = jax.lax.broadcasted_iota(jnp.int32, (block_rows, lane_w), 1)
        valid = (row * lane_w + lane) < remaining
        inter_acc[...] += _fold(jnp.where(valid, p * t, 0.0))
        union_acc[...] += _fold(jnp.where(valid, p + t, 0.0))

    # Clamped overshoot steps (logical_block * block_elems >= n_valid) fall
    # through both branches and are skipped entirely.

    @pl.when(s == steps_per_chunk - 1)
    def _():
        inter = jnp.sum(inter_acc[...])
        union = jnp.sum(union_acc[...])
        out_lane = jax.lax.broadcasted_iota(jnp.int32, (1, 8, _LANE), 2)
        out_ref[...] = (jnp.where(out_lane == 0, inter, 0.0)
                        + jnp.where(out_lane == 1, union, 0.0))


def _dice_partial_sums(predictions, targets):
    """Returns (intersection, union) = (sum(sigmoid(p)*t), sum(sigmoid(p)+t))
    over the flattened inputs, computed by the Pallas kernel."""
    p = predictions.reshape(-1)
    t = targets.reshape(-1)
    if not jnp.issubdtype(p.dtype, jnp.floating):
        p = p.astype(jnp.float32)
    if not jnp.issubdtype(t.dtype, jnp.floating):
        # Binary masks: bf16 keeps them exact and halves their HBM traffic
        # relative to f32.
        t = t.astype(jnp.bfloat16)

    n = int(p.shape[0])
    n_pad = ((n + _LANE - 1) // _LANE) * _LANE
    if n_pad != n:
        # Rare path (element count not a multiple of 128): pad < 128 zeros so
        # the flat array reshapes to lanes; the in-kernel mask drops the tail.
        # TODO(synk): a separate tiny-tail path would avoid this pad copy.
        p = jnp.pad(p, (0, n_pad - n))
        t = jnp.pad(t, (0, n_pad - n))

    block_elems_target, max_chunks = _chip_config()

    # Lane-dense layout: widest lane width that divides the padded length.
    lane_w = _LANE
    for w in (1024, 512, 256):
        if n_pad % w == 0:
            lane_w = w
            break
    rows = n_pad // lane_w

    target_rows = block_elems_target // lane_w       # multiple of 8
    block_rows = rows if rows <= target_rows else target_rows
    num_blocks = -(-rows // block_rows)
    num_chunks = min(max_chunks, num_blocks)
    steps_per_chunk = -(-num_blocks // num_chunks)

    # vreg-resident accumulator: (8, lane_w) when the block folds evenly,
    # otherwise the (small) full block.
    acc_rows = 8 if block_rows % 8 == 0 else block_rows

    block_elems = block_rows * lane_w
    n_full_blocks = n // block_elems                 # blocks with no masking

    p2 = p.reshape(rows, lane_w)
    t2 = t.reshape(rows, lane_w)

    def in_index_map(c, s):
        # Clamp overshoot steps to the last block; the kernel skips them.
        return (jnp.minimum(c * steps_per_chunk + s, num_blocks - 1), 0)

    kernel = functools.partial(
        _dice_kernel,
        steps_per_chunk=steps_per_chunk,
        block_rows=block_rows,
        lane_w=lane_w,
        acc_rows=acc_rows,
        n_valid=n,
        n_full_blocks=n_full_blocks,
    )

    partials = pl.pallas_call(
        kernel,
        out_shape=jax.ShapeDtypeStruct((num_chunks, 8, _LANE), jnp.float32),
        grid=(num_chunks, steps_per_chunk),
        in_specs=[
            pl.BlockSpec((block_rows, lane_w), in_index_map),
            pl.BlockSpec((block_rows, lane_w), in_index_map),
        ],
        out_specs=pl.BlockSpec((1, 8, _LANE), lambda c, s: (c, 0, 0)),
        scratch_shapes=[
            pltpu.VMEM((acc_rows, lane_w), jnp.float32),   # intersection acc
            pltpu.VMEM((acc_rows, lane_w), jnp.float32),   # union acc
        ],
        compiler_params=pltpu.CompilerParams(
            dimension_semantics=("parallel", "arbitrary")),
    )(p2, t2)

    intersection = jnp.sum(partials[:, 0, 0])
    union = jnp.sum(partials[:, 0, 1])
    return intersection, union


def _compute_dice_loss(predictions, targets, smooth=1e-05):
    intersection, union = _dice_partial_sums(predictions, targets)
    dice_score = (2.0 * intersection + smooth) / (union + smooth)
    return 1.0 - dice_score


def binary_dice_loss(predictions, targets, smooth=1e-05):
    """Mirrors BinaryDiceLoss.forward: accepts a single array or a list."""
    if isinstance(predictions, (list, tuple)):
        total = 0.0
        for pred in predictions:
            total = total + _compute_dice_loss(pred, targets, smooth)
        return total / len(predictions)
    return _compute_dice_loss(predictions, targets, smooth)


def _reference_dice_loss(predictions, targets, smooth=1e-05):
    p = jax.nn.sigmoid(predictions.astype(jnp.float32)).reshape(-1)
    t = targets.astype(jnp.float32).reshape(-1)
    inter = jnp.sum(p * t)
    union = jnp.sum(p) + jnp.sum(t)
    return 1.0 - (2.0 * inter + smooth) / (union + smooth)


if __name__ == "__main__":
    key = jax.random.PRNGKey(0)
    k1, k2, k3 = jax.random.split(key, 3)

    # NCHW logits and binary targets.
    preds = jax.random.normal(k1, (2, 4, 16, 16), dtype=jnp.float32)
    targets = (jax.random.uniform(k2, (2, 4, 16, 16)) > 0.5).astype(jnp.float32)

    # single-tensor case
    loss = binary_dice_loss(preds, targets)
    loss = jax.block_until_ready(loss)
    ref = _reference_dice_loss(preds, targets)
    assert jnp.allclose(loss, ref, atol=1e-3, rtol=1e-3), (loss, ref)

    # list-of-predictions case (forward supports lists of logits)
    preds2 = jax.random.normal(k3, (2, 4, 16, 16), dtype=jnp.float32)
    loss_list = binary_dice_loss([preds, preds2], targets)
    loss_list = jax.block_until_ready(loss_list)
    ref_list = 0.5 * (_reference_dice_loss(preds, targets)
                      + _reference_dice_loss(preds2, targets))
    assert jnp.allclose(loss_list, ref_list, atol=1e-3, rtol=1e-3), (loss_list,
                                                                     ref_list)

    print("KERNEL_OK")
</pallas_src>

<mosaic_0001>
module attributes {stable_mosaic.version = 11 : i64} {
  func.func @_dice_kernel(%arg0: i32, %arg1: i32, %arg2: memref<2x1024xf32, #tpu.memory_space<vmem>>, %arg3: memref<2x1024xf32, #tpu.memory_space<vmem>>, %arg4: memref<1x8x128xf32, #tpu.memory_space<vmem>>, %arg5: memref<2x1024xf32, #tpu.memory_space<vmem>>, %arg6: memref<2x1024xf32, #tpu.memory_space<vmem>>) attributes {dimension_semantics = [#tpu.dimension_semantics<parallel>, #tpu.dimension_semantics<arbitrary>], iteration_bounds = array<i64: 1, 1>, scalar_prefetch = 0 : i64, scratch_operands = 2 : i64, tpu.core_type = #tpu.core_type<tc>, window_params = [{transform_indices = @transform_0, window_bounds = array<i64: 2, 1024>}, {transform_indices = @transform_1, window_bounds = array<i64: 2, 1024>}, {transform_indices = @transform_2, window_bounds = array<i64: 1, 8, 128>}]} {
    %c0_i32 = arith.constant 0 : i32
    %0 = arith.cmpi eq, %arg1, %c0_i32 : i32
    %1 = arith.extui %0 : i1 to i32
    %c0_i32_0 = arith.constant 0 : i32
    %2 = arith.cmpi ne, %1, %c0_i32_0 : i32
    scf.if %2 {
      %cst = arith.constant 0.000000e+00 : f32
      %17 = vector.broadcast %cst : f32 to vector<2x1024xf32>
      %c0 = arith.constant 0 : index
      %c0_8 = arith.constant 0 : index
      %18 = vector.load %arg5[%c0, %c0_8] : memref<2x1024xf32, #tpu.memory_space<vmem>>, vector<2x1024xf32>
      tpu.vector_store %arg5[%c0, %c0_8], %17 {strides = array<i32>} : memref<2x1024xf32, #tpu.memory_space<vmem>>, vector<2x1024xf32>,
      %cst_9 = arith.constant 0.000000e+00 : f32
      %19 = vector.broadcast %cst_9 : f32 to vector<2x1024xf32>
      %c0_10 = arith.constant 0 : index
      %c0_11 = arith.constant 0 : index
      %20 = vector.load %arg6[%c0_10, %c0_11] : memref<2x1024xf32, #tpu.memory_space<vmem>>, vector<2x1024xf32>
      tpu.vector_store %arg6[%c0_10, %c0_11], %19 {strides = array<i32>} : memref<2x1024xf32, #tpu.memory_space<vmem>>, vector<2x1024xf32>,
    } else {
    }
    %c1_i32 = arith.constant 1 : i32
    %3 = arith.muli %arg0, %c1_i32 : i32
    %4 = arith.addi %3, %arg1 : i32
    %c1_i32_1 = arith.constant 1 : i32
    %5 = arith.cmpi slt, %4, %c1_i32_1 : i32
    %6 = arith.extui %5 : i1 to i32
    %c0_i32_2 = arith.constant 0 : i32
    %7 = arith.cmpi ne, %6, %c0_i32_2 : i32
    scf.if %7 {
      %c0 = arith.constant 0 : index
      %c0_8 = arith.constant 0 : index
      %17 = vector.load %arg2[%c0, %c0_8] : memref<2x1024xf32, #tpu.memory_space<vmem>>, vector<2x1024xf32>
      %cst = arith.constant -3.000000e+01 : f32
      %18 = vector.broadcast %cst : f32 to vector<2x1024xf32>
      %19 = arith.maximumf %17, %18 : vector<2x1024xf32>
      %cst_9 = arith.constant 0.000000e+00 : f32
      %20 = vector.broadcast %cst_9 : f32 to vector<2x1024xf32>
      %21 = arith.subf %20, %19 : vector<2x1024xf32>
      %22 = math.exp %21 : vector<2x1024xf32>
      %cst_10 = arith.constant 1.000000e+00 : f32
      %23 = vector.broadcast %cst_10 : f32 to vector<2x1024xf32>
      %24 = arith.addf %23, %22 : vector<2x1024xf32>
      %25 = tpu.reciprocal %24 {approx = true} : vector<2x1024xf32> -> vector<2x1024xf32>
      %c0_11 = arith.constant 0 : index
      %c0_12 = arith.constant 0 : index
      %26 = vector.load %arg3[%c0_11, %c0_12] : memref<2x1024xf32, #tpu.memory_space<vmem>>, vector<2x1024xf32>
      %c0_13 = arith.constant 0 : index
      %c0_14 = arith.constant 0 : index
      %27 = vector.load %arg5[%c0_13, %c0_14] : memref<2x1024xf32, #tpu.memory_space<vmem>>, vector<2x1024xf32>
      %28 = arith.mulf %25, %26 : vector<2x1024xf32>
      %29 = arith.addf %27, %28 : vector<2x1024xf32>
      %c0_15 = arith.constant 0 : index
      %c0_16 = arith.constant 0 : index
      %30 = vector.load %arg5[%c0_15, %c0_16] : memref<2x1024xf32, #tpu.memory_space<vmem>>, vector<2x1024xf32>
      tpu.vector_store %arg5[%c0_15, %c0_16], %29 {strides = array<i32>} : memref<2x1024xf32, #tpu.memory_space<vmem>>, vector<2x1024xf32>,
      %c0_17 = arith.constant 0 : index
      %c0_18 = arith.constant 0 : index
      %31 = vector.load %arg6[%c0_17, %c0_18] : memref<2x1024xf32, #tpu.memory_space<vmem>>, vector<2x1024xf32>
      %32 = arith.addf %25, %26 : vector<2x1024xf32>
      %33 = arith.addf %31, %32 : vector<2x1024xf32>
      %c0_19 = arith.constant 0 : index
      %c0_20 = arith.constant 0 : index
      %34 = vector.load %arg6[%c0_19, %c0_20] : memref<2x1024xf32, #tpu.memory_space<vmem>>, vector<2x1024xf32>
      tpu.vector_store %arg6[%c0_19, %c0_20], %33 {strides = array<i32>} : memref<2x1024xf32, #tpu.memory_space<vmem>>, vector<2x1024xf32>,
    } else {
    }
    %c1_i32_3 = arith.constant 1 : i32
    %8 = arith.cmpi sge, %4, %c1_i32_3 : i32
    %c2048_i32 = arith.constant 2048 : i32
    %9 = arith.muli %4, %c2048_i32 : i32
    %c2048_i32_4 = arith.constant 2048 : i32
    %10 = arith.cmpi slt, %9, %c2048_i32_4 : i32
    %11 = arith.andi %8, %10 : i1
    %12 = arith.extui %11 : i1 to i32
    %c0_i32_5 = arith.constant 0 : i32
    %13 = arith.cmpi ne, %12, %c0_i32_5 : i32
    scf.if %13 {
      %c0 = arith.constant 0 : index
      %c0_8 = arith.constant 0 : index
      %17 = vector.load %arg2[%c0, %c0_8] : memref<2x1024xf32, #tpu.memory_space<vmem>>, vector<2x1024xf32>
      %cst = arith.constant -3.000000e+01 : f32
      %18 = vector.broadcast %cst : f32 to vector<2x1024xf32>
      %19 = arith.maximumf %17, %18 : vector<2x1024xf32>
      %cst_9 = arith.constant 0.000000e+00 : f32
      %20 = vector.broadcast %cst_9 : f32 to vector<2x1024xf32>
      %21 = arith.subf %20, %19 : vector<2x1024xf32>
      %22 = math.exp %21 : vector<2x1024xf32>
      %cst_10 = arith.constant 1.000000e+00 : f32
      %23 = vector.broadcast %cst_10 : f32 to vector<2x1024xf32>
      %24 = arith.addf %23, %22 : vector<2x1024xf32>
      %25 = tpu.reciprocal %24 {approx = true} : vector<2x1024xf32> -> vector<2x1024xf32>
      %c0_11 = arith.constant 0 : index
      %c0_12 = arith.constant 0 : index
      %26 = vector.load %arg3[%c0_11, %c0_12] : memref<2x1024xf32, #tpu.memory_space<vmem>>, vector<2x1024xf32>
      %c2048_i32_13 = arith.constant 2048 : i32
      %27 = arith.muli %4, %c2048_i32_13 : i32
      %c2048_i32_14 = arith.constant 2048 : i32
      %28 = arith.subi %c2048_i32_14, %27 : i32
      %29 = tpu.iota {dimensions = array<i32: 0>} : vector<2x1024xi32>
      %30 = tpu.iota {dimensions = array<i32: 1>} : vector<2x1024xi32>
      %c1024_i32 = arith.constant 1024 : i32
      %31 = vector.broadcast %c1024_i32 : i32 to vector<2x1024xi32>
      %32 = arith.muli %29, %31 : vector<2x1024xi32>
      %33 = arith.addi %32, %30 : vector<2x1024xi32>
      %34 = vector.broadcast %28 : i32 to vector<2x1024xi32>
      %35 = arith.cmpi slt, %33, %34 : vector<2x1024xi32>
      %c0_15 = arith.constant 0 : index
      %c0_16 = arith.constant 0 : index
      %36 = vector.load %arg5[%c0_15, %c0_16] : memref<2x1024xf32, #tpu.memory_space<vmem>>, vector<2x1024xf32>
      %37 = arith.mulf %25, %26 : vector<2x1024xf32>
      %cst_17 = arith.constant 0.000000e+00 : f32
      %38 = vector.broadcast %cst_17 : f32 to vector<2x1024xf32>
      %39 = arith.select %35, %37, %38 : vector<2x1024xi1>, vector<2x1024xf32>
      %40 = arith.addf %36, %39 : vector<2x1024xf32>
      %c0_18 = arith.constant 0 : index
      %c0_19 = arith.constant 0 : index
      %41 = vector.load %arg5[%c0_18, %c0_19] : memref<2x1024xf32, #tpu.memory_space<vmem>>, vector<2x1024xf32>
      tpu.vector_store %arg5[%c0_18, %c0_19], %40 {strides = array<i32>} : memref<2x1024xf32, #tpu.memory_space<vmem>>, vector<2x1024xf32>,
      %c0_20 = arith.constant 0 : index
      %c0_21 = arith.constant 0 : index
      %42 = vector.load %arg6[%c0_20, %c0_21] : memref<2x1024xf32, #tpu.memory_space<vmem>>, vector<2x1024xf32>
      %43 = arith.addf %25, %26 : vector<2x1024xf32>
      %cst_22 = arith.constant 0.000000e+00 : f32
      %44 = vector.broadcast %cst_22 : f32 to vector<2x1024xf32>
      %45 = arith.select %35, %43, %44 : vector<2x1024xi1>, vector<2x1024xf32>
      %46 = arith.addf %42, %45 : vector<2x1024xf32>
      %c0_23 = arith.constant 0 : index
      %c0_24 = arith.constant 0 : index
      %47 = vector.load %arg6[%c0_23, %c0_24] : memref<2x1024xf32, #tpu.memory_space<vmem>>, vector<2x1024xf32>
      tpu.vector_store %arg6[%c0_23, %c0_24], %46 {strides = array<i32>} : memref<2x1024xf32, #tpu.memory_space<vmem>>, vector<2x1024xf32>,
    } else {
    }
    %c0_i32_6 = arith.constant 0 : i32
    %14 = arith.cmpi eq, %arg1, %c0_i32_6 : i32
    %15 = arith.extui %14 : i1 to i32
    %c0_i32_7 = arith.constant 0 : i32
    %16 = arith.cmpi ne, %15, %c0_i32_7 : i32
    scf.if %16 {
      %c0 = arith.constant 0 : index
      %c0_8 = arith.constant 0 : index
      %17 = vector.load %arg5[%c0, %c0_8] : memref<2x1024xf32, #tpu.memory_space<vmem>>, vector<2x1024xf32>
      %18 = vector.shape_cast %17 : vector<2x1024xf32> to vector<1x2x1024xf32>
      %cst = arith.constant dense<0.000000e+00> : vector<1xf32>
      %19 = vector.multi_reduction <add>, %18, %cst [1, 2] : vector<1x2x1024xf32> to vector<1xf32>
      %20 = vector.shape_cast %19 : vector<1xf32> to vector<1x1x1xf32>
      %21 = vector.extract %20[0, 0, 0] : f32 from vector<1x1x1xf32>
      %c0_9 = arith.constant 0 : index
      %c0_10 = arith.constant 0 : index
      %22 = vector.load %arg6[%c0_9, %c0_10] : memref<2x1024xf32, #tpu.memory_space<vmem>>, vector<2x1024xf32>
      %23 = vector.shape_cast %22 : vector<2x1024xf32> to vector<1x2x1024xf32>
      %cst_11 = arith.constant dense<0.000000e+00> : vector<1xf32>
      %24 = vector.multi_reduction <add>, %23, %cst_11 [1, 2] : vector<1x2x1024xf32> to vector<1xf32>
      %25 = vector.shape_cast %24 : vector<1xf32> to vector<1x1x1xf32>
      %26 = vector.extract %25[0, 0, 0] : f32 from vector<1x1x1xf32>
      %27 = tpu.iota {dimensions = array<i32: 2>} : vector<1x8x128xi32>
      %c0_i32_12 = arith.constant 0 : i32
      %28 = vector.broadcast %c0_i32_12 : i32 to vector<1x8x128xi32>
      %29 = arith.cmpi eq, %27, %28 : vector<1x8x128xi32>
      %cst_13 = arith.constant 0.000000e+00 : f32
      %30 = vector.broadcast %21 : f32 to vector<1x8x128xf32>
      %31 = vector.broadcast %cst_13 : f32 to vector<1x8x128xf32>
      %32 = arith.select %29, %30, %31 : vector<1x8x128xi1>, vector<1x8x128xf32>
      %c1_i32_14 = arith.constant 1 : i32
      %33 = vector.broadcast %c1_i32_14 : i32 to vector<1x8x128xi32>
      %34 = arith.cmpi eq, %27, %33 : vector<1x8x128xi32>
      %cst_15 = arith.constant 0.000000e+00 : f32
      %35 = vector.broadcast %26 : f32 to vector<1x8x128xf32>
      %36 = vector.broadcast %cst_15 : f32 to vector<1x8x128xf32>
      %37 = arith.select %34, %35, %36 : vector<1x8x128xi1>, vector<1x8x128xf32>
      %38 = arith.addf %32, %37 : vector<1x8x128xf32>
      %c0_16 = arith.constant 0 : index
      %c0_17 = arith.constant 0 : index
      %c0_18 = arith.constant 0 : index
      %39 = vector.load %arg4[%c0_16, %c0_17, %c0_18] : memref<1x8x128xf32, #tpu.memory_space<vmem>>, vector<1x8x128xf32>
      tpu.vector_store %arg4[%c0_16, %c0_17, %c0_18], %38 {strides = array<i32>} : memref<1x8x128xf32, #tpu.memory_space<vmem>>, vector<1x8x128xf32>,
    } else {
    }
    return
  }
  func.func @transform_0(%arg0: i32, %arg1: i32) -> (i32, i32) {
    %c1_i32 = arith.constant 1 : i32
    %0 = arith.muli %arg0, %c1_i32 : i32
    %1 = arith.addi %0, %arg1 : i32
    %c0_i32 = arith.constant 0 : i32
    %2 = arith.minsi %1, %c0_i32 : i32
    %c0_i32_0 = arith.constant 0 : i32
    %c0_i32_1 = arith.constant 0 : i32
    return %2, %c0_i32_0 : i32, i32
  }
  func.func @transform_1(%arg0: i32, %arg1: i32) -> (i32, i32) {
    %c1_i32 = arith.constant 1 : i32
    %0 = arith.muli %arg0, %c1_i32 : i32
    %1 = arith.addi %0, %arg1 : i32
    %c0_i32 = arith.constant 0 : i32
    %2 = arith.minsi %1, %c0_i32 : i32
    %c0_i32_0 = arith.constant 0 : i32
    %c0_i32_1 = arith.constant 0 : i32
    return %2, %c0_i32_0 : i32, i32
  }
  func.func @transform_2(%arg0: i32, %arg1: i32) -> (i32, i32, i32) {
    %c0_i32 = arith.constant 0 : i32
    %c0_i32_0 = arith.constant 0 : i32
    %c0_i32_1 = arith.constant 0 : i32
    return %arg0, %c0_i32, %c0_i32_0 : i32, i32, i32
  }
}

</mosaic_0001>

<llo_original>
// kernel: tpu_custom_call.1
$region0: #{tpu_custom_call.1}
  #allocation0 [shape = 'u32[]', space=smem, size = 0x4, offset = 0x4, fixed_abs, tag = 'smem constant byte address 0x4 - core index']
  #allocation1 [shape = 'u32[144,128]{1,0:T(1,128)}', space=vmem, size = 0x12000, scoped, tag = 'internal scratch']
  #allocation2 [shape = 'f32[2,1024]{1,0:T(2,128)}', space=vmem, size = 0x2000, scoped, tag = 'scratch operand']
  #allocation3 [shape = 'f32[2,1024]{1,0:T(2,128)}', space=vmem, size = 0x2000, scoped, tag = 'scratch operand']
  %s0 = inlined_call_operand.hbm [shape: f32[2,1024], index: 0, kind: input, shape index: {}]
  %s1 = inlined_call_operand.hbm [shape: f32[2,1024], index: 1, kind: input, shape index: {}]
  %s2 = inlined_call_operand.hbm [shape: f32[1,8,128], index: 2, kind: output, shape index: {}]
  %s3 = sld [smem:[#allocation0]]
  $region42: #{tpu_custom_call.1} parent=0
    _
  %s5 = ssub.s32 1, %s3
  %s6 = scalar_select 0, %s5, %s3
  $region1: #{tpu_custom_call.1} parent=0
    #allocation4 [shape = 'u8[8192]{0}', space=vmem, size = 0x2000, scoped, tag = 'input window, operand 0, single buffered']
    #allocation5 [shape = 's32[1]{0}', space=sflag, size = 0x4, scoped, tag = 'scoped memory for tpu_custom_call.1']
    #allocation6 [shape = 's32[1]{0}', space=sflag, size = 0x4, scoped, tag = 'scoped memory for tpu_custom_call.1']
    #allocation7 [shape = 'u8[8192]{0}', space=vmem, size = 0x2000, scoped, tag = 'input window, operand 1, single buffered']
    #allocation8 [shape = 's32[1]{0}', space=sflag, size = 0x4, scoped, tag = 'scoped memory for tpu_custom_call.1']
    #allocation9 [shape = 'u8[4096]{0}', space=vmem, size = 0x1000, scoped, tag = 'output window, operand 0, single buffered']
    %7 = vsyncpa [#allocation5], 0
    %8 = vsyncpa [#allocation8], 0
    %9 = vsyncpa [#allocation6], 0
    // Predicated region
    $region2: #{tpu_custom_call.1} parent=1 // pred_check
      _
    $region3: #{tpu_custom_call.1} parent=1 // pred_check_branch
      %11 = sbr.rel (0) target = $region5
    $region4: #{tpu_custom_call.1} parent=1 // pred_region
      %s12 = sadd.s32 0, 0
      %p13 = scmp.lt.s32.totalorder %s12, 0
      %s14 = scalar_select %p13, %s12, 0
      %s16 = ssub.s32 256, 256
      %17 = vsyncadd [#allocation5], %s16
      %s18 = smul.addr %s14, 8
      %s19 = smul.addr %s18, 32
      %s20 = scalar_lea.hbm %s0, %s19
      %s22 = sshll.u32 [#allocation4], 4
      %s23 = int_to_ptr.vmem [resolvable:$true] %s22
      %25 = dma.hbm_to_vmem [thread:$0]  %s20, 256, %s23, [#allocation5]
    $region5: #{tpu_custom_call.1} parent=1 // pred_fallthru
      _
    // Predicated region
    $region6: #{tpu_custom_call.1} parent=1 // pred_check
      _
    $region7: #{tpu_custom_call.1} parent=1 // pred_check_branch
      %27 = sbr.rel (0) target = $region9
    $region8: #{tpu_custom_call.1} parent=1 // pred_region
      %s28 = sadd.s32 0, 0
      %p29 = scmp.lt.s32.totalorder %s28, 0
      %s30 = scalar_select %p29, %s28, 0
      %s32 = ssub.s32 256, 256
      %33 = vsyncadd [#allocation8], %s32
      %s34 = smul.addr %s30, 8
      %s35 = smul.addr %s34, 32
      %s36 = scalar_lea.hbm %s1, %s35
      %s38 = sshll.u32 [#allocation7], 4
      %s39 = int_to_ptr.vmem [resolvable:$true] %s38
      %41 = dma.hbm_to_vmem [thread:$0]  %s36, 256, %s39, [#allocation8]
    $region9: #{tpu_custom_call.1} parent=1 // pred_fallthru
      _
    // Predicated region
    $region10: #{tpu_custom_call.1} parent=1 // pred_check
      _
    $region11: #{tpu_custom_call.1} parent=1 // pred_check_branch
      %43 = sbr.rel (0) target = $region13
    $region12: #{tpu_custom_call.1} parent=1 // pred_region
      %44 = dma.done [#allocation5], 256
    $region13: #{tpu_custom_call.1} parent=1 // pred_fallthru
      _
    // Predicated region
    $region14: #{tpu_custom_call.1} parent=1 // pred_check
      _
    $region15: #{tpu_custom_call.1} parent=1 // pred_check_branch
      %46 = sbr.rel (0) target = $region17
    $region16: #{tpu_custom_call.1} parent=1 // pred_region
      %47 = dma.done [#allocation8], 256
    $region17: #{tpu_custom_call.1} parent=1 // pred_fallthru
      _
    %s48 = sadd.s32 0, 0
    %p49 = scmp.lt.s32.totalorder %s48, 0
    %s50 = scalar_select %p49, %s48, 0
    %s51 = sadd.s32 0, 0
    %p52 = scmp.lt.s32.totalorder %s51, 0
    %s53 = scalar_select %p52, %s51, 0
    %p54 = scmp.eq.s32.totalorder 0, 0
    // Predicated region
    $region18: #{tpu_custom_call.1} parent=1 // pred_check
      %p55 = pneg %p54
    $region19: #{tpu_custom_call.1} parent=1 // pred_check_branch
      %57 = sbr.rel (%p55) target = $region21
    $region20: #{tpu_custom_call.1} parent=1 // pred_region
      %58 = vst [vmem:[#allocation2] sm:$0xff] 0.0
      %59 = vst [vmem:[#allocation2 + $0x8] sm:$0xff] 0.0
      %60 = vst [vmem:[#allocation3] sm:$0xff] 0.0
      %61 = vst [vmem:[#allocation3 + $0x8] sm:$0xff] 0.0
    $region21: #{tpu_custom_call.1} parent=1 // pred_fallthru
      _
    %s62 = sadd.s32 0, 0
    %p63 = scmp.lt.s32.totalorder %s62, 1
    // Predicated region
    $region22: #{tpu_custom_call.1} parent=1 // pred_check
      %p64 = pneg %p63
    $region23: #{tpu_custom_call.1} parent=1 // pred_check_branch
      %66 = sbr.rel (%p64) target = $region25
    $region24: #{tpu_custom_call.1} parent=1 // pred_region
      %v67 = vld [vmem:[#allocation4] sm:$0xff]
      %v68 = vld [vmem:[#allocation4 + $0x8] sm:$0xff]
      %v69 = vmax.f32 %v67, -30.0
      %v70 = vmax.f32 %v68, -30.0
      %v71 = vsub.f32 0.0, %v69
      %v72 = vsub.f32 0.0, %v70
      %v73 = vmul.f32 %v71, 1.442695
      %v74 = vpow.pop %v73
      %v75 = vmul.f32 %v72, 1.442695
      %v76 = vpow.pop %v75
      %v77 = vadd.f32 %v74, 1.0
      %v78 = vadd.f32 %v76, 1.0
      %v79 = vrcp.pop %v77
      %v80 = vrcp.pop %v78
      %v81 = vld [vmem:[#allocation7] sm:$0xff]
      %v82 = vld [vmem:[#allocation7 + $0x8] sm:$0xff]
      %v83 = vld [vmem:[#allocation2] sm:$0xff]
      %v84 = vld [vmem:[#allocation2 + $0x8] sm:$0xff]
      %v85 = vmul.f32 %v79, %v81
      %v86 = vmul.f32 %v80, %v82
      %v87 = vadd.f32 %v83, %v85
      %v88 = vadd.f32 %v84, %v86
      %89 = vst [vmem:[#allocation2] sm:$0xff] %v87
      %90 = vst [vmem:[#allocation2 + $0x8] sm:$0xff] %v88
      %v91 = vld [vmem:[#allocation3] sm:$0xff]
      %v92 = vld [vmem:[#allocation3 + $0x8] sm:$0xff]
      %v93 = vadd.f32 %v79, %v81
      %v94 = vadd.f32 %v80, %v82
      %v95 = vadd.f32 %v91, %v93
      %v96 = vadd.f32 %v92, %v94
      %97 = vst [vmem:[#allocation3] sm:$0xff] %v95
      %98 = vst [vmem:[#allocation3 + $0x8] sm:$0xff] %v96
    $region25: #{tpu_custom_call.1} parent=1 // pred_fallthru
      _
    %p99 = scmp.ge.s32.totalorder %s62, 1
    %s100 = smul.u32 %s62, 2048
    %p101 = scmp.lt.s32.totalorder %s100, 2048
    %p102 = pnand %p99, %p101
    %p103 = pneg %p102
    // Predicated region
    $region26: #{tpu_custom_call.1} parent=1 // pred_check
      _
    $region27: #{tpu_custom_call.1} parent=1 // pred_check_branch
      %105 = sbr.rel (%p102) target = $region29
    $region28: #{tpu_custom_call.1} parent=1 // pred_region
      %v106 = vld [vmem:[#allocation4] sm:$0xff]
      %v107 = vld [vmem:[#allocation4 + $0x8] sm:$0xff]
      %v108 = vmax.f32 %v106, -30.0
      %v109 = vmax.f32 %v107, -30.0
      %v110 = vsub.f32 0.0, %v108
      %v111 = vsub.f32 0.0, %v109
      %v112 = vmul.f32 %v110, 1.442695
      %v113 = vpow.pop %v112
      %v114 = vmul.f32 %v111, 1.442695
      %v115 = vpow.pop %v114
      %v116 = vadd.f32 %v113, 1.0
      %v117 = vadd.f32 %v115, 1.0
      %v118 = vrcp.pop %v116
      %v119 = vrcp.pop %v117
      %v120 = vld [vmem:[#allocation7] sm:$0xff]
      %v121 = vld [vmem:[#allocation7 + $0x8] sm:$0xff]
      %s122 = ssub.s32 2048, %s100
      %v123 = vlaneseq
      %v124 = vshrl.u32 %v123, 7
      %v125 = vlaneseq
      %v126 = vand.u32 %v125, 127
      %v127 = vadd.s32 %v126, 128
      %v128 = vadd.s32 %v126, 256
      %v129 = vadd.s32 %v126, 384
      %v130 = vadd.s32 %v126, 512
      %v131 = vadd.s32 %v126, 640
      %v132 = vadd.s32 %v126, 768
      %v133 = vadd.s32 %v126, 896
      %v134 = vmul.u32 %v124, 1024
      %v135 = vadd.s32 %v134, %v126
      %v136 = vadd.s32 %v134, %v127
      %v137 = vadd.s32 %v134, %v128
      %v138 = vadd.s32 %v134, %v129
      %v139 = vadd.s32 %v134, %v130
      %v140 = vadd.s32 %v134, %v131
      %v141 = vadd.s32 %v134, %v132
      %v142 = vadd.s32 %v134, %v133
      %v143 = vstv %s122
      %vm144 = vcmp.lt.s32.totalorder %v135, %v143
      %vm145 = vcmp.lt.s32.totalorder %v136, %v143
      %vm146 = vcmp.lt.s32.totalorder %v137, %v143
      %vm147 = vcmp.lt.s32.totalorder %v138, %v143
      %vm148 = vcmp.lt.s32.totalorder %v139, %v143
      %vm149 = vcmp.lt.s32.totalorder %v140, %v143
      %vm150 = vcmp.lt.s32.totalorder %v141, %v143
      %vm151 = vcmp.lt.s32.totalorder %v142, %v143
      %v152 = vld [vmem:[#allocation2] sm:$0xff]
      %v153 = vld [vmem:[#allocation2 + $0x8] sm:$0xff]
      %v154 = vmul.f32 %v118, %v120
      %v155 = vmul.f32 %v119, %v121
      %v158 = vcombine.high %v154, %v154
      %v160 = vunpack.c.l.s4 1983009808
      %v161 = vunpack.c.0.s8 %v160
      %v162 = vlaneseq
      %v163 = vshrl.u32 %v162, 7
      %v164 = vsub.s32 %v161, %v163
      %v165 = vrot.slane %v154, %v164
      %v167 = vunpack.c.l.s4 1983009808
      %v168 = vunpack.c.0.s8 %v167
      %v169 = vlaneseq
      %v170 = vshrl.u32 %v169, 7
      %v171 = vsub.s32 %v168, %v170
      %v172 = vrot.slane %v158, %v171
      %v173 = vcombine.high %v165, %v165
      %v174 = vcombine.high %v172, %v172
      %v175 = vcombine.high %v155, %v155
      %v177 = vunpack.c.l.s4 1983009808
      %v178 = vunpack.c.0.s8 %v177
      %v179 = vlaneseq
      %v180 = vshrl.u32 %v179, 7
      %v181 = vsub.s32 %v178, %v180
      %v182 = vrot.slane %v155, %v181
      %v184 = vunpack.c.l.s4 1983009808
      %v185 = vunpack.c.0.s8 %v184
      %v186 = vlaneseq
      %v187 = vshrl.u32 %v186, 7
      %v188 = vsub.s32 %v185, %v187
      %v189 = vrot.slane %v175, %v188
      %v190 = vcombine.high %v182, %v182
      %v191 = vcombine.high %v189, %v189
      %v200 = vsel %vm144, %v165, 0.0
      %v201 = vsel %vm145, %v173, 0.0
      %v202 = vsel %vm146, %v172, 0.0
      %v203 = vsel %vm147, %v174, 0.0
      %v204 = vsel %vm148, %v182, 0.0
      %v205 = vsel %vm149, %v190, 0.0
      %v206 = vsel %vm150, %v189, 0.0
      %v207 = vsel %vm151, %v191, 0.0
      %v216 = vcombine.low %v200, %v201
      %v217 = vcombine.low %v202, %v203
      %v219 = vunpack.c.l.s4 1983009808
      %v220 = vunpack.c.0.s8 %v219
      %v221 = vlaneseq
      %v222 = vshrl.u32 %v221, 7
      %v223 = vsub.s32 %v220, %v222
      %v224 = vrot.slane %v216, %v223
      %v226 = vunpack.c.l.s4 1983009808
      %v227 = vunpack.c.0.s8 %v226
      %v228 = vlaneseq
      %v229 = vshrl.u32 %v228, 7
      %v230 = vsub.s32 %v227, %v229
      %v231 = vrot.slane %v217, %v230
      %v232 = vcombine.low %v224, %v231
      %v233 = vcombine.low %v204, %v205
      %v234 = vcombine.low %v206, %v207
      %v236 = vunpack.c.l.s4 1983009808
      %v237 = vunpack.c.0.s8 %v236
      %v238 = vlaneseq
      %v239 = vshrl.u32 %v238, 7
      %v240 = vsub.s32 %v237, %v239
      %v241 = vrot.slane %v233, %v240
      %v243 = vunpack.c.l.s4 1983009808
      %v244 = vunpack.c.0.s8 %v243
      %v245 = vlaneseq
      %v246 = vshrl.u32 %v245, 7
      %v247 = vsub.s32 %v244, %v246
      %v248 = vrot.slane %v234, %v247
      %v249 = vcombine.low %v241, %v248
      %v252 = vadd.f32 %v152, %v232
      %v253 = vadd.f32 %v153, %v249
      %254 = vst [vmem:[#allocation2] sm:$0xff] %v252
      %255 = vst [vmem:[#allocation2 + $0x8] sm:$0xff] %v253
      %v256 = vld [vmem:[#allocation3] sm:$0xff]
      %v257 = vld [vmem:[#allocation3 + $0x8] sm:$0xff]
      %v258 = vadd.f32 %v118, %v120
      %v259 = vadd.f32 %v119, %v121
      %v262 = vcombine.high %v258, %v258
      %v264 = vunpack.c.l.s4 1983009808
      %v265 = vunpack.c.0.s8 %v264
      %v266 = vlaneseq
      %v267 = vshrl.u32 %v266, 7
      %v268 = vsub.s32 %v265, %v267
      %v269 = vrot.slane %v258, %v268
      %v271 = vunpack.c.l.s4 1983009808
      %v272 = vunpack.c.0.s8 %v271
      %v273 = vlaneseq
      %v274 = vshrl.u32 %v273, 7
      %v275 = vsub.s32 %v272, %v274
      %v276 = vrot.slane %v262, %v275
      %v277 = vcombine.high %v269, %v269
      %v278 = vcombine.high %v276, %v276
      %v279 = vcombine.high %v259, %v259
      %v281 = vunpack.c.l.s4 1983009808
      %v282 = vunpack.c.0.s8 %v281
      %v283 = vlaneseq
      %v284 = vshrl.u32 %v283, 7
      %v285 = vsub.s32 %v282, %v284
      %v286 = vrot.slane %v259, %v285
      %v288 = vunpack.c.l.s4 1983009808
      %v289 = vunpack.c.0.s8 %v288
      %v290 = vlaneseq
      %v291 = vshrl.u32 %v290, 7
      %v292 = vsub.s32 %v289, %v291
      %v293 = vrot.slane %v279, %v292
      %v294 = vcombine.high %v286, %v286
      %v295 = vcombine.high %v293, %v293
      %v304 = vsel %vm144, %v269, 0.0
      %v305 = vsel %vm145, %v277, 0.0
      %v306 = vsel %vm146, %v276, 0.0
      %v307 = vsel %vm147, %v278, 0.0
      %v308 = vsel %vm148, %v286, 0.0
      %v309 = vsel %vm149, %v294, 0.0
      %v310 = vsel %vm150, %v293, 0.0
      %v311 = vsel %vm151, %v295, 0.0
      %v320 = vcombine.low %v304, %v305
      %v321 = vcombine.low %v306, %v307
      %v323 = vunpack.c.l.s4 1983009808
      %v324 = vunpack.c.0.s8 %v323
      %v325 = vlaneseq
      %v326 = vshrl.u32 %v325, 7
      %v327 = vsub.s32 %v324, %v326
      %v328 = vrot.slane %v320, %v327
      %v330 = vunpack.c.l.s4 1983009808
      %v331 = vunpack.c.0.s8 %v330
      %v332 = vlaneseq
      %v333 = vshrl.u32 %v332, 7
      %v334 = vsub.s32 %v331, %v333
      %v335 = vrot.slane %v321, %v334
      %v336 = vcombine.low %v328, %v335
      %v337 = vcombine.low %v308, %v309
      %v338 = vcombine.low %v310, %v311
      %v340 = vunpack.c.l.s4 1983009808
      %v341 = vunpack.c.0.s8 %v340
      %v342 = vlaneseq
      %v343 = vshrl.u32 %v342, 7
      %v344 = vsub.s32 %v341, %v343
      %v345 = vrot.slane %v337, %v344
      %v347 = vunpack.c.l.s4 1983009808
      %v348 = vunpack.c.0.s8 %v347
      %v349 = vlaneseq
      %v350 = vshrl.u32 %v349, 7
      %v351 = vsub.s32 %v348, %v350
      %v352 = vrot.slane %v338, %v351
      %v353 = vcombine.low %v345, %v352
      %v356 = vadd.f32 %v256, %v336
      %v357 = vadd.f32 %v257, %v353
      %358 = vst [vmem:[#allocation3] sm:$0xff] %v356
      %359 = vst [vmem:[#allocation3 + $0x8] sm:$0xff] %v357
    $region29: #{tpu_custom_call.1} parent=1 // pred_fallthru
      _
    // Predicated region
    $region30: #{tpu_custom_call.1} parent=1 // pred_check
      %p360 = pneg %p54
    $region31: #{tpu_custom_call.1} parent=1 // pred_check_branch
      %362 = sbr.rel (%p360) target = $region33
    $region32: #{tpu_custom_call.1} parent=1 // pred_region
      %v363 = vld [vmem:[#allocation2] sm:$0xff]
      %v364 = vld [vmem:[#allocation2 + $0x8] sm:$0xff]
      %v367 = vcombine.high %v363, %v363
      %v369 = vunpack.c.l.s4 1983009808
      %v370 = vunpack.c.0.s8 %v369
      %v371 = vlaneseq
      %v372 = vshrl.u32 %v371, 7
      %v373 = vsub.s32 %v370, %v372
      %v374 = vrot.slane %v363, %v373
      %v376 = vunpack.c.l.s4 1983009808
      %v377 = vunpack.c.0.s8 %v376
      %v378 = vlaneseq
      %v379 = vshrl.u32 %v378, 7
      %v380 = vsub.s32 %v377, %v379
      %v381 = vrot.slane %v367, %v380
      %v382 = vcombine.high %v374, %v374
      %v383 = vcombine.high %v381, %v381
      %v384 = vcombine.high %v364, %v364
      %v386 = vunpack.c.l.s4 1983009808
      %v387 = vunpack.c.0.s8 %v386
      %v388 = vlaneseq
      %v389 = vshrl.u32 %v388, 7
      %v390 = vsub.s32 %v387, %v389
      %v391 = vrot.slane %v364, %v390
      %v393 = vunpack.c.l.s4 1983009808
      %v394 = vunpack.c.0.s8 %v393
      %v395 = vlaneseq
      %v396 = vshrl.u32 %v395, 7
      %v397 = vsub.s32 %v394, %v396
      %v398 = vrot.slane %v384, %v397
      %v399 = vcombine.high %v391, %v391
      %v400 = vcombine.high %v398, %v398
      %vm409 = vcmask 1041408
      %v410 = vsel %vm409, %v374, 0.0
      %v411 = vsel %vm409, %v382, 0.0
      %v412 = vadd.f32 %v410, %v411
      %v413 = vsel %vm409, %v381, 0.0
      %v414 = vadd.f32 %v412, %v413
      %v415 = vsel %vm409, %v383, 0.0
      %v416 = vadd.f32 %v414, %v415
      %v417 = vsel %vm409, %v391, 0.0
      %v418 = vadd.f32 %v416, %v417
      %v419 = vsel %vm409, %v399, 0.0
      %v420 = vadd.f32 %v418, %v419
      %v421 = vsel %vm409, %v398, 0.0
      %v422 = vadd.f32 %v420, %v421
      %v423 = vsel %vm409, %v400, 0.0
      %v424 = vadd.f32 %v422, %v423
      %425 = vadd.xlane.f32.xlu0 %v424
      %v426 = vpop.xlane.xlu0 %425
      %v427 = vrot.slane %v426, 4
      %v428 = vadd.f32 %v426, %v427
      %v429 = vrot.slane %v428, 2
      %v430 = vadd.f32 %v428, %v429
      %v431 = vrot.slane %v430, 1
      %v432 = vadd.f32 %v430, %v431
      %s433 = vtos %v432
      %v434 = vld [vmem:[#allocation3] sm:$0xff]
      %v435 = vld [vmem:[#allocation3 + $0x8] sm:$0xff]
      %v438 = vcombine.high %v434, %v434
      %v440 = vunpack.c.l.s4 1983009808
      %v441 = vunpack.c.0.s8 %v440
      %v442 = vlaneseq
      %v443 = vshrl.u32 %v442, 7
      %v444 = vsub.s32 %v441, %v443
      %v445 = vrot.slane %v434, %v444
      %v447 = vunpack.c.l.s4 1983009808
      %v448 = vunpack.c.0.s8 %v447
      %v449 = vlaneseq
      %v450 = vshrl.u32 %v449, 7
      %v451 = vsub.s32 %v448, %v450
      %v452 = vrot.slane %v438, %v451
      %v453 = vcombine.high %v445, %v445
      %v454 = vcombine.high %v452, %v452
      %v455 = vcombine.high %v435, %v435
      %v457 = vunpack.c.l.s4 1983009808
      %v458 = vunpack.c.0.s8 %v457
      %v459 = vlaneseq
      %v460 = vshrl.u32 %v459, 7
      %v461 = vsub.s32 %v458, %v460
      %v462 = vrot.slane %v435, %v461
      %v464 = vunpack.c.l.s4 1983009808
      %v465 = vunpack.c.0.s8 %v464
      %v466 = vlaneseq
      %v467 = vshrl.u32 %v466, 7
      %v468 = vsub.s32 %v465, %v467
      %v469 = vrot.slane %v455, %v468
      %v470 = vcombine.high %v462, %v462
      %v471 = vcombine.high %v469, %v469
      %v480 = vsel %vm409, %v445, 0.0
      %v481 = vsel %vm409, %v453, 0.0
      %v482 = vadd.f32 %v480, %v481
      %v483 = vsel %vm409, %v452, 0.0
      %v484 = vadd.f32 %v482, %v483
      %v485 = vsel %vm409, %v454, 0.0
      %v486 = vadd.f32 %v484, %v485
      %v487 = vsel %vm409, %v462, 0.0
      %v488 = vadd.f32 %v486, %v487
      %v489 = vsel %vm409, %v470, 0.0
      %v490 = vadd.f32 %v488, %v489
      %v491 = vsel %vm409, %v469, 0.0
      %v492 = vadd.f32 %v490, %v491
      %v493 = vsel %vm409, %v471, 0.0
      %v494 = vadd.f32 %v492, %v493
      %495 = vadd.xlane.f32.xlu0 %v494
      %v496 = vpop.xlane.xlu0 %495
      %v497 = vrot.slane %v496, 4
      %v498 = vadd.f32 %v496, %v497
      %v499 = vrot.slane %v498, 2
      %v500 = vadd.f32 %v498, %v499
      %v501 = vrot.slane %v500, 1
      %v502 = vadd.f32 %v500, %v501
      %s503 = vtos %v502
      %v504 = vlaneseq
      %v505 = vand.u32 %v504, 127
      %vm506 = vcmp.eq.s32.totalorder %v505, 0
      %v507 = vstv %s433
      %v508 = vsel %vm506, %v507, 0.0
      %vm509 = vcmp.eq.s32.totalorder %v505, 1
      %v510 = vstv %s503
      %v511 = vsel %vm509, %v510, 0.0
      %v512 = vadd.f32 %v508, %v511
      %513 = vst [vmem:[#allocation9] sm:$0xff] %v512
    $region33: #{tpu_custom_call.1} parent=1 // pred_fallthru
      _
    // Predicated region
    $region34: #{tpu_custom_call.1} parent=1 // pred_check
      _
    $region35: #{tpu_custom_call.1} parent=1 // pred_check_branch
      %515 = sbr.rel (0) target = $region37
    $region36: #{tpu_custom_call.1} parent=1 // pred_region
      %s517 = ssub.s32 128, 128
      %518 = vsyncadd [#allocation6], %s517
      %s520 = sshll.u32 [#allocation9], 4
      %s521 = int_to_ptr.vmem [resolvable:$true] %s520
      %523 = dma.vmem_to_hbm [thread:$0]  %s521, 128, %s2, [#allocation6]
    $region37: #{tpu_custom_call.1} parent=1 // pred_fallthru
      _
    // Predicated region
    $region38: #{tpu_custom_call.1} parent=1 // pred_check
      _
    $region39: #{tpu_custom_call.1} parent=1 // pred_check_branch
      %525 = sbr.rel (0) target = $region41
    $region40: #{tpu_custom_call.1} parent=1 // pred_region
      %526 = dma.done [#allocation6], 128
    $region41: #{tpu_custom_call.1} parent=1 // pred_fallthru
      _
    %527 = vsyncpa [#allocation5], 1
    %528 = vsyncpa [#allocation8], 1
    %529 = vsyncpa [#allocation6], 1

</llo_original>
